<compile_context>
chip_gen: v6e
topology: v6e:2x2x1
jax: 0.10.0
libtpu: 0.0.40
codegen_flags: <defaults>
</compile_context>

<pallas_src>
import functools

import jax
import jax.numpy as jnp
from jax.experimental import pallas as pl
from jax.experimental.pallas import tpu as pltpu

_LN_EPS = 1e-5
_ROW_TILE = 256  # token-row tile; multiple of 8, small enough for any VMEM budget


def _row_tile(M):
    return M if M <= _ROW_TILE else _ROW_TILE


def _ln_f32(x, g, b, eps):
    mu = jnp.mean(x, axis=-1, keepdims=True)
    var = jnp.mean(jnp.square(x - mu), axis=-1, keepdims=True)
    return (x - mu) * jax.lax.rsqrt(var + eps) * g + b


def _gelu_f32(y):
    # exact (erf) GELU, matching torch.nn.GELU default
    return 0.5 * y * (1.0 + jax.lax.erf(y * 0.7071067811865476))


# ----------------------------------------------------------------------------
# Fused LayerNorm / Linear / GELU / residual kernel
# ----------------------------------------------------------------------------

def _make_fused_linear_kernel(ln_in, ln_out, act, residual, eps):
    def kernel(*refs):
        idx = 0
        x_ref = refs[idx]; idx += 1
        if ln_in:
            gi_ref, bi_ref = refs[idx], refs[idx + 1]; idx += 2
        w_ref, b_ref = refs[idx], refs[idx + 1]; idx += 2
        if ln_out:
            go_ref, bo_ref = refs[idx], refs[idx + 1]; idx += 2
        if residual:
            r_ref = refs[idx]; idx += 1
        o_ref = refs[idx]

        x = x_ref[...].astype(jnp.float32)
        if ln_in:
            x = _ln_f32(x, gi_ref[...].astype(jnp.float32),
                        bi_ref[...].astype(jnp.float32), eps)
        # bf16 operands -> MXU, fp32 accumulation
        y = jnp.dot(x.astype(jnp.bfloat16), w_ref[...],
                    preferred_element_type=jnp.float32)
        y = y + b_ref[...].astype(jnp.float32)
        if act == "gelu":
            y = _gelu_f32(y)
        if ln_out:
            y = _ln_f32(y, go_ref[...].astype(jnp.float32),
                        bo_ref[...].astype(jnp.float32), eps)
        if residual:
            y = y + r_ref[...].astype(jnp.float32)
        o_ref[...] = y.astype(o_ref.dtype)
    return kernel


def fused_linear(x, w, b, *, ln_in=None, ln_out=None, act=None, residual=None,
                 out_dtype=jnp.bfloat16, eps=_LN_EPS):
    """out = [LN_out]( act( [LN_in](x) @ w + b ) ) [+ residual], tiled over rows."""
    shape = x.shape
    K = shape[-1]
    x2 = x.reshape(-1, K)
    M = x2.shape[0]
    N = w.shape[1]
    TM = _row_tile(M)

    inputs = [x2]
    in_specs = [pl.BlockSpec((TM, K), lambda i: (i, 0))]
    if ln_in is not None:
        inputs += [ln_in["g"].reshape(1, K), ln_in["b"].reshape(1, K)]
        in_specs += [pl.BlockSpec((1, K), lambda i: (0, 0)),
                     pl.BlockSpec((1, K), lambda i: (0, 0))]
    inputs += [w, b.reshape(1, N)]
    in_specs += [pl.BlockSpec((K, N), lambda i: (0, 0)),
                 pl.BlockSpec((1, N), lambda i: (0, 0))]
    if ln_out is not None:
        inputs += [ln_out["g"].reshape(1, N), ln_out["b"].reshape(1, N)]
        in_specs += [pl.BlockSpec((1, N), lambda i: (0, 0)),
                     pl.BlockSpec((1, N), lambda i: (0, 0))]
    if residual is not None:
        inputs.append(residual.reshape(-1, N))
        in_specs.append(pl.BlockSpec((TM, N), lambda i: (i, 0)))

    kernel = _make_fused_linear_kernel(ln_in is not None, ln_out is not None,
                                       act, residual is not None, eps)
    out = pl.pallas_call(
        kernel,
        out_shape=jax.ShapeDtypeStruct((M, N), out_dtype),
        grid=(pl.cdiv(M, TM),),
        in_specs=in_specs,
        out_specs=pl.BlockSpec((TM, N), lambda i: (i, 0)),
        compiler_params=pltpu.CompilerParams(dimension_semantics=("parallel",)),
    )(*inputs)
    return out.reshape(shape[:-1] + (N,))


# ----------------------------------------------------------------------------
# Standalone LayerNorm (needed when LN(x) feeds both q-proj and the SR path)
# ----------------------------------------------------------------------------

def _layernorm_kernel(x_ref, g_ref, b_ref, o_ref, *, eps):
    x = x_ref[...].astype(jnp.float32)
    y = _ln_f32(x, g_ref[...].astype(jnp.float32), b_ref[...].astype(jnp.float32), eps)
    o_ref[...] = y.astype(o_ref.dtype)


def layernorm(x, p, eps=_LN_EPS):
    shape = x.shape
    x2 = x.reshape(-1, shape[-1])
    M, C = x2.shape
    TM = _row_tile(M)
    out = pl.pallas_call(
        functools.partial(_layernorm_kernel, eps=eps),
        out_shape=jax.ShapeDtypeStruct((M, C), x.dtype),
        grid=(pl.cdiv(M, TM),),
        in_specs=[pl.BlockSpec((TM, C), lambda i: (i, 0)),
                  pl.BlockSpec((1, C), lambda i: (0, 0)),
                  pl.BlockSpec((1, C), lambda i: (0, 0))],
        out_specs=pl.BlockSpec((TM, C), lambda i: (i, 0)),
        compiler_params=pltpu.CompilerParams(dimension_semantics=("parallel",)),
    )(x2, p["g"].reshape(1, C), p["b"].reshape(1, C))
    return out.reshape(shape)


# ----------------------------------------------------------------------------
# Fused MLP: x + fc2( GELU( fc1( LN(x) ) ) ), both weights resident in VMEM
# ----------------------------------------------------------------------------

def _mlp_kernel(x_ref, g_ref, bln_ref, w1_ref, b1_ref, w2_ref, b2_ref, o_ref, *, eps):
    x = x_ref[...].astype(jnp.float32)
    xn = _ln_f32(x, g_ref[...].astype(jnp.float32), bln_ref[...].astype(jnp.float32), eps)
    h = jnp.dot(xn.astype(jnp.bfloat16), w1_ref[...], preferred_element_type=jnp.float32)
    h = _gelu_f32(h + b1_ref[...].astype(jnp.float32))
    y = jnp.dot(h.astype(jnp.bfloat16), w2_ref[...], preferred_element_type=jnp.float32)
    y = y + b2_ref[...].astype(jnp.float32)
    o_ref[...] = (x + y).astype(o_ref.dtype)


def fused_mlp(x, ln, fc1, fc2, eps=_LN_EPS):
    B, N, C = x.shape
    x2 = x.reshape(-1, C)
    M = x2.shape[0]
    Hd = fc1["w"].shape[1]
    TM = _row_tile(M)
    out = pl.pallas_call(
        functools.partial(_mlp_kernel, eps=eps),
        out_shape=jax.ShapeDtypeStruct((M, C), x.dtype),
        grid=(pl.cdiv(M, TM),),
        in_specs=[
            pl.BlockSpec((TM, C), lambda i: (i, 0)),
            pl.BlockSpec((1, C), lambda i: (0, 0)),
            pl.BlockSpec((1, C), lambda i: (0, 0)),
            pl.BlockSpec((C, Hd), lambda i: (0, 0)),
            pl.BlockSpec((1, Hd), lambda i: (0, 0)),
            pl.BlockSpec((Hd, C), lambda i: (0, 0)),
            pl.BlockSpec((1, C), lambda i: (0, 0)),
        ],
        out_specs=pl.BlockSpec((TM, C), lambda i: (i, 0)),
        compiler_params=pltpu.CompilerParams(dimension_semantics=("parallel",)),
    )(x2, ln["g"].reshape(1, C), ln["b"].reshape(1, C),
      fc1["w"], fc1["b"].reshape(1, Hd), fc2["w"], fc2["b"].reshape(1, C))
    return out.reshape(B, N, C)


# ----------------------------------------------------------------------------
# Multi-head attention: grid over batch, all heads per step (batched dot_general)
# ----------------------------------------------------------------------------

def _attn_kernel(q_ref, k_ref, v_ref, o_ref, *, scale):
    q = q_ref[...]                                    # (H, N, d)  bf16
    k = k_ref[...]                                    # (H, M, d)  bf16
    v = v_ref[...]                                    # (H, M, d)  bf16
    s = jax.lax.dot_general(q, k, (((2,), (2,)), ((0,), (0,))),
                            preferred_element_type=jnp.float32) * scale   # (H, N, M)
    s = s - jnp.max(s, axis=-1, keepdims=True)
    e = jnp.exp(s)
    p = e * pl.reciprocal(jnp.sum(e, axis=-1, keepdims=True), approx=True)
    o = jax.lax.dot_general(p.astype(v.dtype), v, (((2,), (1,)), ((0,), (0,))),
                            preferred_element_type=jnp.float32)           # (H, N, d)
    o_ref[...] = o.astype(o_ref.dtype)


def attention(q, k, v, num_heads, scale):
    """q: (B, N, C), k/v: (B, M, C) -> (B, N, C)."""
    B, N, C = q.shape
    M = k.shape[1]
    d = C // num_heads

    def split_heads(t, L):
        return t.reshape(B, L, num_heads, d).transpose(0, 2, 1, 3).reshape(B * num_heads, L, d)

    qh, kh, vh = split_heads(q, N), split_heads(k, M), split_heads(v, M)
    out = pl.pallas_call(
        functools.partial(_attn_kernel, scale=scale),
        out_shape=jax.ShapeDtypeStruct((B * num_heads, N, d), q.dtype),
        grid=(B,),
        in_specs=[
            pl.BlockSpec((num_heads, N, d), lambda b: (b, 0, 0)),
            pl.BlockSpec((num_heads, M, d), lambda b: (b, 0, 0)),
            pl.BlockSpec((num_heads, M, d), lambda b: (b, 0, 0)),
        ],
        out_specs=pl.BlockSpec((num_heads, N, d), lambda b: (b, 0, 0)),
        compiler_params=pltpu.CompilerParams(dimension_semantics=("parallel",)),
    )(qh, kh, vh)
    return out.reshape(B, num_heads, N, d).transpose(0, 2, 1, 3).reshape(B, N, C)


# ----------------------------------------------------------------------------
# Glue: conv-with-kernel==stride lowered to space-to-depth + matmul
# ----------------------------------------------------------------------------

def space_to_depth(x_bhwc, p):
    """(B, H, W, C) -> (B, (H/p)*(W/p), C*p*p), (c, ph, pw) fastest-varying order."""
    # TODO(synk): if PyTorch-pretrained Conv2d weights are loaded, reshape them from
    # (C_out, C_in, kh, kw) with the same (C_in, kh, kw) flatten order.
    B, H, W, C = x_bhwc.shape
    x = x_bhwc.reshape(B, H // p, p, W // p, p, C)
    x = x.transpose(0, 1, 3, 5, 2, 4)            # (B, H/p, W/p, C, p, p)
    return x.reshape(B, (H // p) * (W // p), C * p * p)


# ----------------------------------------------------------------------------
# PVT forward
# ----------------------------------------------------------------------------

def attention_forward(x, H, W, p_attn, norm1, num_heads, sr_ratio):
    B, N, C = x.shape
    d = C // num_heads
    scale = d ** -0.5

    if sr_ratio > 1:
        x_ln = layernorm(x, norm1)                                  # shared by q and SR path
        q = fused_linear(x_ln, p_attn["q"]["w"], p_attn["q"]["b"])
        xr = space_to_depth(x_ln.reshape(B, H, W, C), sr_ratio)     # spatial reduction (conv k=s=sr)
        xr = fused_linear(xr, p_attn["sr"]["w"], p_attn["sr"]["b"], ln_out=p_attn["sr_norm"])
        kv_w = jnp.concatenate([p_attn["k"]["w"], p_attn["v"]["w"]], axis=1)
        kv_b = jnp.concatenate([p_attn["k"]["b"], p_attn["v"]["b"]], axis=0)
        kv = fused_linear(xr, kv_w, kv_b)
        k, v = kv[..., :C], kv[..., C:]
    else:
        qkv_w = jnp.concatenate([p_attn["q"]["w"], p_attn["k"]["w"], p_attn["v"]["w"]], axis=1)
        qkv_b = jnp.concatenate([p_attn["q"]["b"], p_attn["k"]["b"], p_attn["v"]["b"]], axis=0)
        qkv = fused_linear(x, qkv_w, qkv_b, ln_in=norm1)
        q, k, v = qkv[..., :C], qkv[..., C:2 * C], qkv[..., 2 * C:]

    o = attention(q, k, v, num_heads, scale)
    # output projection with the residual add fused into the epilogue
    return fused_linear(o, p_attn["proj"]["w"], p_attn["proj"]["b"], residual=x)


def block_forward(x, H, W, p, num_heads, sr_ratio):
    if "downsample" in p:                                           # PatchMerge: conv k=2,s=2 + LN
        B, _, C = x.shape
        xr = space_to_depth(x.reshape(B, H, W, C), 2)
        x = fused_linear(xr, p["downsample"]["proj"]["w"], p["downsample"]["proj"]["b"],
                         ln_out=p["downsample"]["norm"])
        H, W = H // 2, W // 2
    # drop_path == identity at inference
    x = attention_forward(x, H, W, p["attn"], p["norm1"], num_heads, sr_ratio)
    x = fused_mlp(x, p["norm2"], p["mlp"]["fc1"], p["mlp"]["fc2"])
    return x, (H, W)


def pvt_forward(params, x_nchw, cfg):
    B, C, H, W = x_nchw.shape
    ps = cfg["patch_size"]

    # PatchEmbed: conv(k=ps, s=ps) + LayerNorm (fused into one kernel)
    xh = jnp.transpose(x_nchw, (0, 2, 3, 1)).astype(jnp.bfloat16)   # NCHW -> NHWC
    tok = space_to_depth(xh, ps)                                    # (B, Np, C*ps*ps)
    x = fused_linear(tok, params["patch_embed"]["proj"]["w"],
                     params["patch_embed"]["proj"]["b"],
                     ln_out=params["patch_embed"]["norm"])
    H, W = H // ps, W // ps

    x = (x.astype(jnp.float32) + params["pos_embed"]).astype(jnp.bfloat16)

    idx = 0
    for i_layer in range(len(cfg["depths"])):
        for _ in range(cfg["depths"][i_layer]):
            x, (H, W) = block_forward(
                x, H, W, params["blocks"][idx],
                cfg["num_heads"][i_layer], cfg["sr_ratios"][i_layer])
            idx += 1

    x = jnp.mean(x.astype(jnp.float32), axis=1)                     # global average pool (glue)
    x = fused_linear(x, params["head"]["w"], params["head"]["b"],
                     ln_in=params["fc_norm"], out_dtype=jnp.float32)
    return x


# ----------------------------------------------------------------------------
# Deterministic parameter construction (weights bf16, biases/LN fp32)
# ----------------------------------------------------------------------------

def _dense(key, fan_in, fan_out):
    w = jax.random.normal(key, (fan_in, fan_out), jnp.float32) * (1.0 / jnp.sqrt(fan_in))
    return {"w": w.astype(jnp.bfloat16), "b": jnp.zeros((fan_out,), jnp.float32)}


def _ln(dim):
    return {"g": jnp.ones((dim,), jnp.float32), "b": jnp.zeros((dim,), jnp.float32)}


def init_params(key, cfg):
    keys = iter(jax.random.split(key, 512))
    ed = cfg["embed_dims"]
    ps = cfg["patch_size"]
    num_patches = (cfg["img_size"] // ps) ** 2

    params = {
        "patch_embed": {
            "proj": _dense(next(keys), cfg["in_chans"] * ps * ps, ed[0]),
            "norm": _ln(ed[0]),
        },
        "pos_embed": jax.random.normal(next(keys), (1, num_patches, ed[0]), jnp.float32) * 0.02,
        "blocks": [],
        "fc_norm": _ln(ed[-1]),
        "head": _dense(next(keys), ed[-1], cfg["num_classes"]),
    }

    for i_layer in range(len(cfg["depths"])):
        dim = ed[i_layer]
        sr = cfg["sr_ratios"][i_layer]
        mlp_hidden = dim * cfg["mlp_ratios"][i_layer]
        for dep in range(cfg["depths"][i_layer]):
            blk = {
                "norm1": _ln(dim),
                "norm2": _ln(dim),
                "attn": {
                    "q": _dense(next(keys), dim, dim),
                    "k": _dense(next(keys), dim, dim),
                    "v": _dense(next(keys), dim, dim),
                    "proj": _dense(next(keys), dim, dim),
                },
                "mlp": {
                    "fc1": _dense(next(keys), dim, mlp_hidden),
                    "fc2": _dense(next(keys), mlp_hidden, dim),
                },
            }
            if sr > 1:
                blk["attn"]["sr"] = _dense(next(keys), dim * sr * sr, dim)
                blk["attn"]["sr_norm"] = _ln(dim)
            if i_layer > 0 and dep == 0:
                blk["downsample"] = {
                    "proj": _dense(next(keys), ed[i_layer - 1] * 4, dim),
                    "norm": _ln(dim),
                }
            params["blocks"].append(blk)
    return params


# ----------------------------------------------------------------------------
# Main
# ----------------------------------------------------------------------------

if __name__ == "__main__":
    cfg = dict(
        img_size=64,
        patch_size=4,
        in_chans=3,
        embed_dims=[16, 32, 32, 64],
        depths=[1, 1, 1, 1],
        num_heads=[1, 2, 2, 4],
        mlp_ratios=[2, 2, 2, 2],
        sr_ratios=[8, 4, 2, 1],
        num_classes=10,
    )

    key = jax.random.PRNGKey(0)
    k_param, k_input = jax.random.split(key)
    params = init_params(k_param, cfg)

    x = jax.random.normal(k_input, (2, cfg["in_chans"], cfg["img_size"], cfg["img_size"]),
                          jnp.float32)

    logits = pvt_forward(params, x, cfg)
    jax.block_until_ready(logits)
    assert logits.shape == (2, cfg["num_classes"]), logits.shape
    assert bool(jnp.all(jnp.isfinite(logits)))
    print("KERNEL_OK")
</pallas_src>

<mosaic_0001>
module attributes {stable_mosaic.version = 11 : i64} {
  func.func @kernel(%arg0: i32, %arg1: memref<256x48xbf16, #tpu.memory_space<vmem>>, %arg2: memref<48x16xbf16, #tpu.memory_space<vmem>>, %arg3: memref<1x16xf32, #tpu.memory_space<vmem>>, %arg4: memref<1x16xf32, #tpu.memory_space<vmem>>, %arg5: memref<1x16xf32, #tpu.memory_space<vmem>>, %arg6: memref<256x16xbf16, #tpu.memory_space<vmem>>) attributes {dimension_semantics = [#tpu.dimension_semantics<parallel>], iteration_bounds = array<i64: 2>, scalar_prefetch = 0 : i64, scratch_operands = 0 : i64, tpu.core_type = #tpu.core_type<tc>, window_params = [{transform_indices = @transform_0, window_bounds = array<i64: 256, 48>}, {pipeline_mode = #tpu.pipeline_mode<synchronous>, transform_indices = @transform_1, window_bounds = array<i64: 48, 16>}, {pipeline_mode = #tpu.pipeline_mode<synchronous>, transform_indices = @transform_2, window_bounds = array<i64: 1, 16>}, {pipeline_mode = #tpu.pipeline_mode<synchronous>, transform_indices = @transform_3, window_bounds = array<i64: 1, 16>}, {pipeline_mode = #tpu.pipeline_mode<synchronous>, transform_indices = @transform_4, window_bounds = array<i64: 1, 16>}, {transform_indices = @transform_5, window_bounds = array<i64: 256, 16>}]} {
    %c0 = arith.constant 0 : index
    %c0_0 = arith.constant 0 : index
    %0 = vector.load %arg1[%c0, %c0_0] : memref<256x48xbf16, #tpu.memory_space<vmem>>, vector<256x48xbf16>
    %1 = arith.extf %0 : vector<256x48xbf16> to vector<256x48xf32>
    %2 = arith.truncf %1 : vector<256x48xf32> to vector<256x48xbf16>
    %c0_1 = arith.constant 0 : index
    %c0_2 = arith.constant 0 : index
    %3 = vector.load %arg2[%c0_1, %c0_2] : memref<48x16xbf16, #tpu.memory_space<vmem>>, vector<48x16xbf16>
    %cst = arith.constant dense<0.000000e+00> : vector<256x16xf32>
    %4 = tpu.matmul %2, %3, %cst {dimension_numbers = #tpu.dot_dimension_numbers<[1], [0], [0], [1], [0, 0, 1, 1], [], []>} : vector<256x48xbf16>, vector<48x16xbf16>, vector<256x16xf32> -> vector<256x16xf32>
    %c0_3 = arith.constant 0 : index
    %c0_4 = arith.constant 0 : index
    %5 = vector.load %arg3[%c0_3, %c0_4] : memref<1x16xf32, #tpu.memory_space<vmem>>, vector<1x16xf32>
    %6 = vector.broadcast %5 : vector<1x16xf32> to vector<256x16xf32>
    %7 = arith.addf %4, %6 : vector<256x16xf32>
    %c0_5 = arith.constant 0 : index
    %c0_6 = arith.constant 0 : index
    %8 = vector.load %arg4[%c0_5, %c0_6] : memref<1x16xf32, #tpu.memory_space<vmem>>, vector<1x16xf32>
    %c0_7 = arith.constant 0 : index
    %c0_8 = arith.constant 0 : index
    %9 = vector.load %arg5[%c0_7, %c0_8] : memref<1x16xf32, #tpu.memory_space<vmem>>, vector<1x16xf32>
    %cst_9 = arith.constant dense<0.000000e+00> : vector<256xf32>
    %10 = vector.multi_reduction <add>, %7, %cst_9 [1] : vector<256x16xf32> to vector<256xf32>
    %11 = vector.shape_cast %10 : vector<256xf32> to vector<256x1xf32>
    %cst_10 = arith.constant 1.600000e+01 : f32
    %12 = vector.broadcast %cst_10 : f32 to vector<256x1xf32>
    %13 = arith.divf %11, %12 : vector<256x1xf32>
    %14 = vector.broadcast %13 : vector<256x1xf32> to vector<256x16xf32>
    %15 = arith.subf %7, %14 : vector<256x16xf32>
    %16 = arith.mulf %15, %15 : vector<256x16xf32>
    %cst_11 = arith.constant dense<0.000000e+00> : vector<256xf32>
    %17 = vector.multi_reduction <add>, %16, %cst_11 [1] : vector<256x16xf32> to vector<256xf32>
    %18 = vector.shape_cast %17 : vector<256xf32> to vector<256x1xf32>
    %cst_12 = arith.constant 1.600000e+01 : f32
    %19 = vector.broadcast %cst_12 : f32 to vector<256x1xf32>
    %20 = arith.divf %18, %19 : vector<256x1xf32>
    %21 = vector.broadcast %13 : vector<256x1xf32> to vector<256x16xf32>
    %22 = arith.subf %7, %21 : vector<256x16xf32>
    %cst_13 = arith.constant 9.99999974E-6 : f32
    %23 = vector.broadcast %cst_13 : f32 to vector<256x1xf32>
    %24 = arith.addf %20, %23 : vector<256x1xf32>
    %25 = math.rsqrt %24 : vector<256x1xf32>
    %26 = vector.broadcast %25 : vector<256x1xf32> to vector<256x16xf32>
    %27 = arith.mulf %22, %26 : vector<256x16xf32>
    %28 = vector.broadcast %8 : vector<1x16xf32> to vector<256x16xf32>
    %29 = arith.mulf %27, %28 : vector<256x16xf32>
    %30 = vector.broadcast %9 : vector<1x16xf32> to vector<256x16xf32>
    %31 = arith.addf %29, %30 : vector<256x16xf32>
    %32 = arith.truncf %31 : vector<256x16xf32> to vector<256x16xbf16>
    %c0_14 = arith.constant 0 : index
    %c0_15 = arith.constant 0 : index
    %33 = vector.load %arg6[%c0_14, %c0_15] : memref<256x16xbf16, #tpu.memory_space<vmem>>, vector<256x16xbf16>
    tpu.vector_store %arg6[%c0_14, %c0_15], %32 {strides = array<i32>} : memref<256x16xbf16, #tpu.memory_space<vmem>>, vector<256x16xbf16>,
    return
  }
  func.func @transform_0(%arg0: i32) -> (i32, i32) {
    %c0_i32 = arith.constant 0 : i32
    %c0_i32_0 = arith.constant 0 : i32
    return %arg0, %c0_i32 : i32, i32
  }
  func.func @transform_1(%arg0: i32) -> (i32, i32) {
    %c0_i32 = arith.constant 0 : i32
    %c0_i32_0 = arith.constant 0 : i32
    %c0_i32_1 = arith.constant 0 : i32
    return %c0_i32, %c0_i32_0 : i32, i32
  }
  func.func @transform_2(%arg0: i32) -> (i32, i32) {
    %c0_i32 = arith.constant 0 : i32
    %c0_i32_0 = arith.constant 0 : i32
    %c0_i32_1 = arith.constant 0 : i32
    return %c0_i32, %c0_i32_0 : i32, i32
  }
  func.func @transform_3(%arg0: i32) -> (i32, i32) {
    %c0_i32 = arith.constant 0 : i32
    %c0_i32_0 = arith.constant 0 : i32
    %c0_i32_1 = arith.constant 0 : i32
    return %c0_i32, %c0_i32_0 : i32, i32
  }
  func.func @transform_4(%arg0: i32) -> (i32, i32) {
    %c0_i32 = arith.constant 0 : i32
    %c0_i32_0 = arith.constant 0 : i32
    %c0_i32_1 = arith.constant 0 : i32
    return %c0_i32, %c0_i32_0 : i32, i32
  }
  func.func @transform_5(%arg0: i32) -> (i32, i32) {
    %c0_i32 = arith.constant 0 : i32
    %c0_i32_0 = arith.constant 0 : i32
    return %arg0, %c0_i32 : i32, i32
  }
}

</mosaic_0001>

<llo_original>
// kernel: tpu_custom_call.1
$region0: #{tpu_custom_call.1}
  #allocation0 [shape = 'u32[]', space=smem, size = 0x4, offset = 0x4, fixed_abs, tag = 'smem constant byte address 0x4 - core index']
  #allocation1 [shape = 'u32[144,128]{1,0:T(1,128)}', space=vmem, size = 0x12000, scoped, tag = 'internal scratch']
  %s0 = inlined_call_operand.vmem [shape: bf16[512,48], index: 0, kind: input, shape index: {}]
  %s1 = inlined_call_operand.vmem [shape: bf16[48,16], index: 1, kind: input, shape index: {}]
  %s2 = inlined_call_operand.vmem [shape: f32[1,16], index: 2, kind: input, shape index: {}]
  %s3 = inlined_call_operand.vmem [shape: f32[1,16], index: 3, kind: input, shape index: {}]
  %s4 = inlined_call_operand.vmem [shape: f32[1,16], index: 4, kind: input, shape index: {}]
  %s5 = inlined_call_operand.vmem [shape: bf16[512,16], index: 5, kind: output, shape index: {}]
  %s6 = sld [smem:[#allocation0]]
  $region53: #{tpu_custom_call.1} parent=0
    _
  %s8 = ssub.s32 1, %s6
  %s9 = scalar_select 0, %s8, %s6
  loop: start=0, step=1, limit=4
  $region2: #{tpu_custom_call.1} parent=0 // loop_pre_header
    _
  $region3: #{tpu_custom_call.1} parent=0 // loop_header
    %s11 = sphi 0, %s15
    %p12 = scmp.ge.s32.totalorder %s11, 4
    %s21 = sphi 0, %s23
    %s24 = sphi 0, %s21
    %s25 = sphi 0, %s24
    %s41 = sphi 0, %s25
    %s45 = sphi 0, %s45
    %s47 = sphi 0, %s45
    %s48 = sphi 0, %s47
    %s62 = sphi 0, %s48
    %s66 = sphi 0, %s66
    %s68 = sphi 0, %s66
    %s69 = sphi 0, %s68
    %s83 = sphi 0, %s69
    %s87 = sphi 0, %s87
    %s89 = sphi 0, %s87
    %s90 = sphi 0, %s89
    %s104 = sphi 0, %s90
    %s108 = sphi 0, %s108
    %s110 = sphi 0, %s108
    %s111 = sphi 0, %s110
    %s125 = sphi 0, %s111
    %s131 = sphi 0, %s133
    %s134 = sphi 0, %s131
    %s135 = sphi 0, %s134
    %s151 = sphi 0, %s135
  $region4: #{tpu_custom_call.1} parent=0 // loop_header_branch
    %14 = sbr.rel (%p12) target = $region8
  $region5: #{tpu_custom_call.1} parent=0 // loop_body
    %s16 = ssub.s32 %s11, 1
    %s17 = ssub.s32 %s11, 2
    %s18 = sadd.s32 %s11, 1
    %s19 = ssub.s32 %s11, %s18
    %p20 = scmp.eq.s32.totalorder %s19, 0
    %s22 = sadd.s32 %s21, 1
    %s23 = scalar_select %p20, %s21, %s22
    %p26 = pneg %p20
    %p27 = scmp.eq.s32.totalorder %s11, 1
    %p28 = por %p26, %p27
    %p29 = scmp.ne.s32.totalorder %s21, %s24
    %p30 = scmp.eq.s32.totalorder %s11, 0
    %p31 = por %p29, %p30
    %p32 = scmp.ne.s32.totalorder %s21, %s24
    %p33 = scmp.eq.s32.totalorder %s16, 1
    %p34 = por %p32, %p33
    %p35 = scmp.ne.s32.totalorder %s24, %s25
    %p36 = scmp.eq.s32.totalorder %s16, 0
    %p37 = por %p35, %p36
    %p38 = scmp.ne.s32.totalorder %s24, %s25
    %p39 = scmp.eq.s32.totalorder %s17, 1
    %p40 = por %p38, %p39
    %p42 = scmp.ne.s32.totalorder %s25, %s41
    %p43 = scmp.eq.s32.totalorder %s17, 0
    %p44 = por %p42, %p43
    %s46 = sadd.s32 %s45, 1
    %p49 = scmp.eq.s32.totalorder %s11, 1
    %p50 = scmp.ne.s32.totalorder %s45, %s47
    %p51 = scmp.eq.s32.totalorder %s11, 0
    %p52 = por %p50, %p51
    %p53 = scmp.ne.s32.totalorder %s45, %s47
    %p54 = scmp.eq.s32.totalorder %s16, 1
    %p55 = por %p53, %p54
    %p56 = scmp.ne.s32.totalorder %s47, %s48
    %p57 = scmp.eq.s32.totalorder %s16, 0
    %p58 = por %p56, %p57
    %p59 = scmp.ne.s32.totalorder %s47, %s48
    %p60 = scmp.eq.s32.totalorder %s17, 1
    %p61 = por %p59, %p60
    %p63 = scmp.ne.s32.totalorder %s48, %s62
    %p64 = scmp.eq.s32.totalorder %s17, 0
    %p65 = por %p63, %p64
    %s67 = sadd.s32 %s66, 1
    %p70 = scmp.eq.s32.totalorder %s11, 1
    %p71 = scmp.ne.s32.totalorder %s66, %s68
    %p72 = scmp.eq.s32.totalorder %s11, 0
    %p73 = por %p71, %p72
    %p74 = scmp.ne.s32.totalorder %s66, %s68
    %p75 = scmp.eq.s32.totalorder %s16, 1
    %p76 = por %p74, %p75
    %p77 = scmp.ne.s32.totalorder %s68, %s69
    %p78 = scmp.eq.s32.totalorder %s16, 0
    %p79 = por %p77, %p78
    %p80 = scmp.ne.s32.totalorder %s68, %s69
    %p81 = scmp.eq.s32.totalorder %s17, 1
    %p82 = por %p80, %p81
    %p84 = scmp.ne.s32.totalorder %s69, %s83
    %p85 = scmp.eq.s32.totalorder %s17, 0
    %p86 = por %p84, %p85
    %s88 = sadd.s32 %s87, 1
    %p91 = scmp.eq.s32.totalorder %s11, 1
    %p92 = scmp.ne.s32.totalorder %s87, %s89
    %p93 = scmp.eq.s32.totalorder %s11, 0
    %p94 = por %p92, %p93
    %p95 = scmp.ne.s32.totalorder %s87, %s89
    %p96 = scmp.eq.s32.totalorder %s16, 1
    %p97 = por %p95, %p96
    %p98 = scmp.ne.s32.totalorder %s89, %s90
    %p99 = scmp.eq.s32.totalorder %s16, 0
    %p100 = por %p98, %p99
    %p101 = scmp.ne.s32.totalorder %s89, %s90
    %p102 = scmp.eq.s32.totalorder %s17, 1
    %p103 = por %p101, %p102
    %p105 = scmp.ne.s32.totalorder %s90, %s104
    %p106 = scmp.eq.s32.totalorder %s17, 0
    %p107 = por %p105, %p106
    %s109 = sadd.s32 %s108, 1
    %p112 = scmp.eq.s32.totalorder %s11, 1
    %p113 = scmp.ne.s32.totalorder %s108, %s110
    %p114 = scmp.eq.s32.totalorder %s11, 0
    %p115 = por %p113, %p114
    %p116 = scmp.ne.s32.totalorder %s108, %s110
    %p117 = scmp.eq.s32.totalorder %s16, 1
    %p118 = por %p116, %p117
    %p119 = scmp.ne.s32.totalorder %s110, %s111
    %p120 = scmp.eq.s32.totalorder %s16, 0
    %p121 = por %p119, %p120
    %p122 = scmp.ne.s32.totalorder %s110, %s111
    %p123 = scmp.eq.s32.totalorder %s17, 1
    %p124 = por %p122, %p123
    %p126 = scmp.ne.s32.totalorder %s111, %s125
    %p127 = scmp.eq.s32.totalorder %s17, 0
    %p128 = por %p126, %p127
    %s129 = ssub.s32 %s11, %s18
    %p130 = scmp.eq.s32.totalorder %s129, 0
    %s132 = sadd.s32 %s131, 1
    %s133 = scalar_select %p130, %s131, %s132
    %p136 = pneg %p130
    %p137 = scmp.eq.s32.totalorder %s11, 1
    %p138 = por %p136, %p137
    %p139 = scmp.ne.s32.totalorder %s131, %s134
    %p140 = scmp.eq.s32.totalorder %s11, 0
    %p141 = por %p139, %p140
    %p142 = scmp.ne.s32.totalorder %s131, %s134
    %p143 = scmp.eq.s32.totalorder %s16, 1
    %p144 = por %p142, %p143
    %p145 = scmp.ne.s32.totalorder %s134, %s135
    %p146 = scmp.eq.s32.totalorder %s16, 0
    %p147 = por %p145, %p146
    %p148 = scmp.ne.s32.totalorder %s134, %s135
    %p149 = scmp.eq.s32.totalorder %s17, 1
    %p150 = por %p148, %p149
    %p152 = scmp.ne.s32.totalorder %s135, %s151
    %p153 = scmp.eq.s32.totalorder %s17, 0
    %p154 = por %p152, %p153
    %p155 = scmp.le.s32.totalorder 1, %s11
    %p156 = scmp.lt.s32.totalorder %s11, 3
    %p157 = pnand %p155, %p156
    %p158 = pneg %p157
    // Predicated region
    $region9: #{tpu_custom_call.1} parent=5 // pred_check
      _
    $region10: #{tpu_custom_call.1} parent=5 // pred_check_branch
      %160 = sbr.rel (%p157) target = $region12
    $region11: #{tpu_custom_call.1} parent=5 // pred_region
      %s161 = ssub.s32 %s11, 1
      // Predicated region
      $region13: #{tpu_custom_call.1} parent=11 // pred_check
        %p162 = pneg %p58
      $region14: #{tpu_custom_call.1} parent=11 // pred_check_branch
        %164 = sbr.rel (%p162) target = $region16
      $region15: #{tpu_custom_call.1} parent=11 // pred_region
        _
      $region16: #{tpu_custom_call.1} parent=11 // pred_fallthru
        _
      // Predicated region
      $region17: #{tpu_custom_call.1} parent=11 // pred_check
        %p165 = pneg %p79
      $region18: #{tpu_custom_call.1} parent=11 // pred_check_branch
        %167 = sbr.rel (%p165) target = $region20
      $region19: #{tpu_custom_call.1} parent=11 // pred_region
        _
      $region20: #{tpu_custom_call.1} parent=11 // pred_fallthru
        _
      // Predicated region
      $region21: #{tpu_custom_call.1} parent=11 // pred_check
        %p168 = pneg %p100
      $region22: #{tpu_custom_call.1} parent=11 // pred_check_branch
        %170 = sbr.rel (%p168) target = $region24
      $region23: #{tpu_custom_call.1} parent=11 // pred_region
        _
      $region24: #{tpu_custom_call.1} parent=11 // pred_fallthru
        _
      // Predicated region
      $region25: #{tpu_custom_call.1} parent=11 // pred_check
        %p171 = pneg %p121
      $region26: #{tpu_custom_call.1} parent=11 // pred_check_branch
        %173 = sbr.rel (%p171) target = $region28
      $region27: #{tpu_custom_call.1} parent=11 // pred_region
        _
      $region28: #{tpu_custom_call.1} parent=11 // pred_fallthru
        _
    $region12: #{tpu_custom_call.1} parent=5 // pred_fallthru
      _
    %p174 = scmp.lt.s32.totalorder %s11, 2
    // Predicated region
    $region29: #{tpu_custom_call.1} parent=5 // pred_check
      %p175 = pneg %p174
    $region30: #{tpu_custom_call.1} parent=5 // pred_check_branch
      %177 = sbr.rel (%p175) target = $region32
    $region31: #{tpu_custom_call.1} parent=5 // pred_region
      // Predicated region
      $region33: #{tpu_custom_call.1} parent=31 // pred_check
        %p178 = pneg %p31
      $region34: #{tpu_custom_call.1} parent=31 // pred_check_branch
        %180 = sbr.rel (%p178) target = $region36
      $region35: #{tpu_custom_call.1} parent=31 // pred_region
        %s181 = smul.u32 32, %s11
        %p182 = scmp.lt.s32.totalorder %s181, 63
        %s183 = scalar_select %p182, %s181, 63
        %s184 = smul.addr %s183, 4
        %s185 = scalar_lea.vmem %s0, %s184
        %s186 = smul.u32 32, %s11
      $region36: #{tpu_custom_call.1} parent=31 // pred_fallthru
        _
    $region32: #{tpu_custom_call.1} parent=5 // pred_fallthru
      _
    %p187 = scmp.le.s32.totalorder 1, %s11
    %p188 = scmp.lt.s32.totalorder %s11, 3
    %p189 = pnand %p187, %p188
    %p190 = pneg %p189
    // Predicated region
    $region37: #{tpu_custom_call.1} parent=5 // pred_check
      _
    $region38: #{tpu_custom_call.1} parent=5 // pred_check_branch
      %192 = sbr.rel (%p189) target = $region40
    $region39: #{tpu_custom_call.1} parent=5 // pred_region
      %s193 = ssub.s32 %s11, 1
      %s194 = smul.u32 32, %s16
      %p195 = scmp.lt.s32.totalorder %s194, 63
      %s196 = scalar_select %p195, %s194, 63
      %s197 = smul.addr %s196, 4
      %s198 = scalar_lea.vmem %s0, %s197
      %p199 = pneg %p37
      %p200 = pneg %p34
      %p201 = pneg %p58
      %p202 = pneg %p55
      %p203 = pneg %p79
      %p204 = pneg %p76
      %p205 = pneg %p100
      %p206 = pneg %p97
      %p207 = pneg %p121
      %p208 = pneg %p118
      %p209 = pneg %p147
      %p210 = pneg %p144
      %s211 = smul.u32 32, %s16
      %p212 = scmp.lt.s32.totalorder %s211, 63
      %s213 = scalar_select %p212, %s211, 63
      %s214 = smul.addr %s213, 4
      %s215 = scalar_lea.vmem %s5, %s214
      %s216 = smul.u32 32, %s16
      %p217 = scmp.lt.s32.totalorder %s216, 63
      %s218 = scalar_select %p217, %s216, 63
      %s219 = smul.addr %s218, 4
      %s220 = scalar_lea.vmem %s0, %s219
      %s221 = smul.u32 32, %s16
      %s222 = smul.u32 32, %s16
      %p223 = scmp.lt.s32.totalorder %s222, 63
      %s224 = scalar_select %p223, %s222, 63
      %s225 = smul.addr %s224, 4
      %s226 = scalar_lea.vmem %s5, %s225
      %s227 = smul.u32 32, %s16
      %v229 = vld [vmem:[%s220] sm:$0xf]
      %v230 = vld [vmem:[%s220 + $0x4] sm:$0xf]
      %v231 = vld [vmem:[%s220 + $0x8] sm:$0xf]
      %v232 = vld [vmem:[%s220 + $0xc] sm:$0xf]
      %v233 = vld [vmem:[%s220 + $0x10] sm:$0xf]
      %v234 = vld [vmem:[%s220 + $0x14] sm:$0xf]
      %v235 = vld [vmem:[%s220 + $0x18] sm:$0xf]
      %v236 = vld [vmem:[%s220 + $0x1c] sm:$0xf]
      %v237 = vld [vmem:[%s220 + $0x20] sm:$0xf]
      %v238 = vld [vmem:[%s220 + $0x24] sm:$0xf]
      %v239 = vld [vmem:[%s220 + $0x28] sm:$0xf]
      %v240 = vld [vmem:[%s220 + $0x2c] sm:$0xf]
      %v241 = vld [vmem:[%s220 + $0x30] sm:$0xf]
      %v242 = vld [vmem:[%s220 + $0x34] sm:$0xf]
      %v243 = vld [vmem:[%s220 + $0x38] sm:$0xf]
      %v244 = vld [vmem:[%s220 + $0x3c] sm:$0xf]
      %v245 = vld [vmem:[%s220 + $0x40] sm:$0xf]
      %v246 = vld [vmem:[%s220 + $0x44] sm:$0xf]
      %v247 = vld [vmem:[%s220 + $0x48] sm:$0xf]
      %v248 = vld [vmem:[%s220 + $0x4c] sm:$0xf]
      %v249 = vld [vmem:[%s220 + $0x50] sm:$0xf]
      %v250 = vld [vmem:[%s220 + $0x54] sm:$0xf]
      %v251 = vld [vmem:[%s220 + $0x58] sm:$0xf]
      %v252 = vld [vmem:[%s220 + $0x5c] sm:$0xf]
      %v253 = vld [vmem:[%s220 + $0x60] sm:$0xf]
      %v254 = vld [vmem:[%s220 + $0x64] sm:$0xf]
      %v255 = vld [vmem:[%s220 + $0x68] sm:$0xf]
      %v256 = vld [vmem:[%s220 + $0x6c] sm:$0xf]
      %v257 = vld [vmem:[%s220 + $0x70] sm:$0xf]
      %v258 = vld [vmem:[%s220 + $0x74] sm:$0xf]
      %v259 = vld [vmem:[%s220 + $0x78] sm:$0xf]
      %v260 = vld [vmem:[%s220 + $0x7c] sm:$0xf]
      %v261 = vld [vmem:[%s1] sm:$0xf]
      %v262 = vld [vmem:[%s1 + $0x4] sm:$0xf]
      %v263 = vld [vmem:[%s1 + $0x8] sm:$0xf]
      %v264 = vld [vmem:[%s1 + $0xc] sm:$0xf]
      %v265 = vld [vmem:[%s1 + $0x10] sm:$0xf]
      %v266 = vld [vmem:[%s1 + $0x14] sm:$0xf]
      %v267 = vld [vmem:[%s2] sm:$0x1]
      %v269 = vlaneseq
      %v270 = vshrl.u32 %v269, 7
      %v271 = vsub.s32 0, %v270
      %v272 = vrot.slane %v267, %v271
      %v306 = vunpack.c.l.b16 %v229
      %v307 = vunpack.c.l.b16 %v230
      %v308 = vunpack.c.l.b16 %v231
      %v309 = vunpack.c.l.b16 %v232
      %v310 = vunpack.c.l.b16 %v233
      %v311 = vunpack.c.l.b16 %v234
      %v312 = vunpack.c.l.b16 %v235
      %v313 = vunpack.c.l.b16 %v236
      %v314 = vunpack.c.l.b16 %v237
      %v315 = vunpack.c.l.b16 %v238
      %v316 = vunpack.c.l.b16 %v239
      %v317 = vunpack.c.l.b16 %v240
      %v318 = vunpack.c.l.b16 %v241
      %v319 = vunpack.c.l.b16 %v242
      %v320 = vunpack.c.l.b16 %v243
      %v321 = vunpack.c.l.b16 %v244
      %v322 = vunpack.c.l.b16 %v245
      %v323 = vunpack.c.l.b16 %v246
      %v324 = vunpack.c.l.b16 %v247
      %v325 = vunpack.c.l.b16 %v248
      %v326 = vunpack.c.l.b16 %v249
      %v327 = vunpack.c.l.b16 %v250
      %v328 = vunpack.c.l.b16 %v251
      %v329 = vunpack.c.l.b16 %v252
      %v330 = vunpack.c.l.b16 %v253
      %v331 = vunpack.c.l.b16 %v254
      %v332 = vunpack.c.l.b16 %v255
      %v333 = vunpack.c.l.b16 %v256
      %v334 = vunpack.c.l.b16 %v257
      %v335 = vunpack.c.l.b16 %v258
      %v336 = vunpack.c.l.b16 %v259
      %v337 = vunpack.c.l.b16 %v260
      %v338 = vpack.c.b16 %v307, %v306
      %v339 = vpack.c.b16 %v309, %v308
      %v340 = vpack.c.b16 %v311, %v310
      %v341 = vpack.c.b16 %v313, %v312
      %v342 = vpack.c.b16 %v315, %v314
      %v343 = vpack.c.b16 %v317, %v316
      %v344 = vpack.c.b16 %v319, %v318
      %v345 = vpack.c.b16 %v321, %v320
      %v346 = vpack.c.b16 %v323, %v322
      %v347 = vpack.c.b16 %v325, %v324
      %v348 = vpack.c.b16 %v327, %v326
      %v349 = vpack.c.b16 %v329, %v328
      %v350 = vpack.c.b16 %v331, %v330
      %v351 = vpack.c.b16 %v333, %v332
      %v352 = vpack.c.b16 %v335, %v334
      %v353 = vpack.c.b16 %v337, %v336
      %v360 = vunpack.c.l.b16 %v261
      %v361 = vunpack.c.l.b16 %v262
      %v362 = vunpack.c.l.b16 %v263
      %v363 = vunpack.c.l.b16 %v264
      %v364 = vunpack.c.l.b16 %v265
      %v365 = vunpack.c.l.b16 %v266
      %v366 = vpack.c.b16 %v361, %v360
      %v367 = vpack.c.b16 %v363, %v362
      %v368 = vpack.c.b16 %v365, %v364
      %vm372 = vcmask 392192
      %v374 = vsel %vm372, %v338, 0
      %v377 = vsel %vm372, %v339, 0
      %v380 = vsel %vm372, %v340, 0
      %v383 = vsel %vm372, %v341, 0
      %v386 = vsel %vm372, %v342, 0
      %v389 = vsel %vm372, %v343, 0
      %v392 = vsel %vm372, %v344, 0
      %v395 = vsel %vm372, %v345, 0
      %v398 = vsel %vm372, %v346, 0
      %v401 = vsel %vm372, %v347, 0
      %v404 = vsel %vm372, %v348, 0
      %v407 = vsel %vm372, %v349, 0
      %v410 = vsel %vm372, %v350, 0
      %v413 = vsel %vm372, %v351, 0
      %v416 = vsel %vm372, %v352, 0
      %v419 = vsel %vm372, %v353, 0
      %421 = vmatprep.subr.bf16.mxu0 0
      %422 = vmatpush1.bf16.msra.mxu0 0
      %423 = vmatprep.subr.bf16.mxu0 0
      %424 = vmatpush1.bf16.msra.mxu0 0
      %425 = vmatprep.subr.bf16.mxu0 0
      %426 = vmatpush1.bf16.msra.mxu0 0
      %427 = vmatprep.subr.bf16.mxu0 0
      %428 = vmatpush1.bf16.msra.mxu0 0
      %429 = vmatprep.subr.bf16.mxu0 0
      %430 = vmatpush1.bf16.msra.mxu0 0
      %431 = vmatprep.subr.bf16.mxu0 0
      %432 = vmatpush1.bf16.msra.mxu0 %v368
      %433 = vmatprep.subr.bf16.mxu0 0
      %434 = vmatpush1.bf16.msra.mxu0 %v367
      %435 = vmatprep.subr.bf16.mxu0 0
      %436 = vmatpush1.bf16.msra.mxu0 %v366
      %437 = vmatprep.subr.bf16.mxu0 0
      %438 = vmatpush2.bf16.msra.mxu0 0
      %439 = vmatprep.subr.bf16.mxu0 0
      %440 = vmatpush2.bf16.msra.mxu0 0
      %441 = vmatprep.subr.bf16.mxu0 0
      %442 = vmatpush2.bf16.msra.mxu0 0
      %443 = vmatprep.subr.bf16.mxu0 0
      %444 = vmatpush2.bf16.msra.mxu0 0
      %445 = vmatprep.subr.bf16.mxu0 0
      %446 = vmatpush2.bf16.msra.mxu0 0
      %447 = vmatprep.subr.bf16.mxu0 0
      %448 = vmatpush2.bf16.msra.mxu0 0
      %449 = vmatprep.subr.bf16.mxu0 0
      %450 = vmatpush2.bf16.msra.mxu0 0
      %451 = vmatprep.subr.bf16.mxu0 0
      %452 = vmatpush2.bf16.msra.mxu0 0
      %453 = vmatprep.mubr.bf16.mxu0 0
      %454 = vmatmul.mubr.bf16.gmra.mxu0 %v374
      %v455 = vpop.f32.mrf.mxu0
      %v456 = vadd.f32 %v272, %v455
      %v457 = vpop.f32.mrf.mxu0
      %v458 = vpop.f32.mrf.mxu0
      %v459 = vadd.f32 %v272, %v458
      %v460 = vpop.f32.mrf.mxu0
      %461 = vmatprep.mubr.bf16.mxu0 0
      %462 = vmatmul.mubr.bf16.gmra.mxu0 %v377
      %v463 = vpop.f32.mrf.mxu0
      %v464 = vadd.f32 %v272, %v463
      %v465 = vpop.f32.mrf.mxu0
      %v466 = vpop.f32.mrf.mxu0
      %v467 = vadd.f32 %v272, %v466
      %v468 = vpop.f32.mrf.mxu0
      %469 = vmatprep.mubr.bf16.mxu0 0
      %470 = vmatmul.mubr.bf16.gmra.mxu0 %v380
      %v471 = vpop.f32.mrf.mxu0
      %v472 = vadd.f32 %v272, %v471
      %v473 = vpop.f32.mrf.mxu0
      %v474 = vpop.f32.mrf.mxu0
      %v475 = vadd.f32 %v272, %v474
      %v476 = vpop.f32.mrf.mxu0
      %477 = vmatprep.mubr.bf16.mxu0 0
      %478 = vmatmul.mubr.bf16.gmra.mxu0 %v383
      %v479 = vpop.f32.mrf.mxu0
      %v480 = vadd.f32 %v272, %v479
      %v481 = vpop.f32.mrf.mxu0
      %v482 = vpop.f32.mrf.mxu0
      %v483 = vadd.f32 %v272, %v482
      %v484 = vpop.f32.mrf.mxu0
      %485 = vmatprep.mubr.bf16.mxu0 0
      %486 = vmatmul.mubr.bf16.gmra.mxu0 %v386
      %v487 = vpop.f32.mrf.mxu0
      %v488 = vadd.f32 %v272, %v487
      %v489 = vpop.f32.mrf.mxu0
      %v490 = vpop.f32.mrf.mxu0
      %v491 = vadd.f32 %v272, %v490
      %v492 = vpop.f32.mrf.mxu0
      %493 = vmatprep.mubr.bf16.mxu0 0
      %494 = vmatmul.mubr.bf16.gmra.mxu0 %v389
      %v495 = vpop.f32.mrf.mxu0
      %v496 = vadd.f32 %v272, %v495
      %v497 = vpop.f32.mrf.mxu0
      %v498 = vpop.f32.mrf.mxu0
      %v499 = vadd.f32 %v272, %v498
      %v500 = vpop.f32.mrf.mxu0
      %501 = vmatprep.mubr.bf16.mxu0 0
      %502 = vmatmul.mubr.bf16.gmra.mxu0 %v392
      %v503 = vpop.f32.mrf.mxu0
      %v504 = vadd.f32 %v272, %v503
      %v505 = vpop.f32.mrf.mxu0
      %v506 = vpop.f32.mrf.mxu0
      %v507 = vadd.f32 %v272, %v506
      %v508 = vpop.f32.mrf.mxu0
      %509 = vmatprep.mubr.bf16.mxu0 0
      %510 = vmatmul.mubr.bf16.gmra.mxu0 %v395
      %v511 = vpop.f32.mrf.mxu0
      %v512 = vadd.f32 %v272, %v511
      %v513 = vpop.f32.mrf.mxu0
      %v514 = vpop.f32.mrf.mxu0
      %v515 = vadd.f32 %v272, %v514
      %v516 = vpop.f32.mrf.mxu0
      %517 = vmatprep.mubr.bf16.mxu0 0
      %518 = vmatmul.mubr.bf16.gmra.mxu0 %v398
      %v519 = vpop.f32.mrf.mxu0
      %v520 = vadd.f32 %v272, %v519
      %v521 = vpop.f32.mrf.mxu0
      %v522 = vpop.f32.mrf.mxu0
      %v523 = vadd.f32 %v272, %v522
      %v524 = vpop.f32.mrf.mxu0
      %525 = vmatprep.mubr.bf16.mxu0 0
      %526 = vmatmul.mubr.bf16.gmra.mxu0 %v401
      %v527 = vpop.f32.mrf.mxu0
      %v528 = vadd.f32 %v272, %v527
      %v529 = vpop.f32.mrf.mxu0
      %v530 = vpop.f32.mrf.mxu0
      %v531 = vadd.f32 %v272, %v530
      %v532 = vpop.f32.mrf.mxu0
      %533 = vmatprep.mubr.bf16.mxu0 0
      %534 = vmatmul.mubr.bf16.gmra.mxu0 %v404
      %v535 = vpop.f32.mrf.mxu0
      %v536 = vadd.f32 %v272, %v535
      %v537 = vpop.f32.mrf.mxu0
      %v538 = vpop.f32.mrf.mxu0
      %v539 = vadd.f32 %v272, %v538
      %v540 = vpop.f32.mrf.mxu0
      %541 = vmatprep.mubr.bf16.mxu0 0
      %542 = vmatmul.mubr.bf16.gmra.mxu0 %v407
      %v543 = vpop.f32.mrf.mxu0
      %v544 = vadd.f32 %v272, %v543
      %v545 = vpop.f32.mrf.mxu0
      %v546 = vpop.f32.mrf.mxu0
      %v547 = vadd.f32 %v272, %v546
      %v548 = vpop.f32.mrf.mxu0
      %549 = vmatprep.mubr.bf16.mxu0 0
      %550 = vmatmul.mubr.bf16.gmra.mxu0 %v410
      %v551 = vpop.f32.mrf.mxu0
      %v552 = vadd.f32 %v272, %v551
      %v553 = vpop.f32.mrf.mxu0
      %v554 = vpop.f32.mrf.mxu0
      %v555 = vadd.f32 %v272, %v554
      %v556 = vpop.f32.mrf.mxu0
      %557 = vmatprep.mubr.bf16.mxu0 0
      %558 = vmatmul.mubr.bf16.gmra.mxu0 %v413
      %v559 = vpop.f32.mrf.mxu0
      %v560 = vadd.f32 %v272, %v559
      %v561 = vpop.f32.mrf.mxu0
      %v562 = vpop.f32.mrf.mxu0
      %v563 = vadd.f32 %v272, %v562
      %v564 = vpop.f32.mrf.mxu0
      %565 = vmatprep.mubr.bf16.mxu0 0
      %566 = vmatmul.mubr.bf16.gmra.mxu0 %v416
      %v567 = vpop.f32.mrf.mxu0
      %v568 = vadd.f32 %v272, %v567
      %v569 = vpop.f32.mrf.mxu0
      %v570 = vpop.f32.mrf.mxu0
      %v571 = vadd.f32 %v272, %v570
      %v572 = vpop.f32.mrf.mxu0
      %573 = vmatprep.mubr.bf16.mxu0 0
      %574 = vmatmul.mubr.bf16.gmra.mxu0 %v419
      %v575 = vpop.f32.mrf.mxu0
      %v576 = vadd.f32 %v272, %v575
      %v577 = vpop.f32.mrf.mxu0
      %v578 = vpop.f32.mrf.mxu0
      %v579 = vadd.f32 %v272, %v578
      %v580 = vpop.f32.mrf.mxu0
      %581 = vdwg.mxu0
      %v582 = vld [vmem:[%s3] sm:$0x1]
      %v583 = vld [vmem:[%s4] sm:$0x1]
      %vm584 = vcmask 130048
      %v585 = vsel %vm584, %v456, 0.0
      %586 = vadd.xlane.f32.xlu0 %v585
      %v587 = vpop.xlane.xlu0 %586
      %v588 = vsel %vm584, %v459, 0.0
      %589 = vadd.xlane.f32.xlu0 %v588
      %v590 = vpop.xlane.xlu0 %589
      %v591 = vsel %vm584, %v464, 0.0
      %592 = vadd.xlane.f32.xlu0 %v591
      %v593 = vpop.xlane.xlu0 %592
      %v594 = vsel %vm584, %v467, 0.0
      %595 = vadd.xlane.f32.xlu0 %v594
      %v596 = vpop.xlane.xlu0 %595
      %v597 = vsel %vm584, %v472, 0.0
      %598 = vadd.xlane.f32.xlu0 %v597
      %v599 = vpop.xlane.xlu0 %598
      %v600 = vsel %vm584, %v475, 0.0
      %601 = vadd.xlane.f32.xlu0 %v600
      %v602 = vpop.xlane.xlu0 %601
      %v603 = vsel %vm584, %v480, 0.0
      %604 = vadd.xlane.f32.xlu0 %v603
      %v605 = vpop.xlane.xlu0 %604
      %v606 = vsel %vm584, %v483, 0.0
      %607 = vadd.xlane.f32.xlu0 %v606
      %v608 = vpop.xlane.xlu0 %607
      %v609 = vsel %vm584, %v488, 0.0
      %610 = vadd.xlane.f32.xlu0 %v609
      %v611 = vpop.xlane.xlu0 %610
      %v612 = vsel %vm584, %v491, 0.0
      %613 = vadd.xlane.f32.xlu0 %v612
      %v614 = vpop.xlane.xlu0 %613
      %v615 = vsel %vm584, %v496, 0.0
      %616 = vadd.xlane.f32.xlu0 %v615
      %v617 = vpop.xlane.xlu0 %616
      %v618 = vsel %vm584, %v499, 0.0
      %619 = vadd.xlane.f32.xlu0 %v618
      %v620 = vpop.xlane.xlu0 %619
      %v621 = vsel %vm584, %v504, 0.0
      %622 = vadd.xlane.f32.xlu0 %v621
      %v623 = vpop.xlane.xlu0 %622
      %v624 = vsel %vm584, %v507, 0.0
      %625 = vadd.xlane.f32.xlu0 %v624
      %v626 = vpop.xlane.xlu0 %625
      %v627 = vsel %vm584, %v512, 0.0
      %628 = vadd.xlane.f32.xlu0 %v627
      %v629 = vpop.xlane.xlu0 %628
      %v630 = vsel %vm584, %v515, 0.0
      %631 = vadd.xlane.f32.xlu0 %v630
      %v632 = vpop.xlane.xlu0 %631
      %v633 = vsel %vm584, %v520, 0.0
      %634 = vadd.xlane.f32.xlu0 %v633
      %v635 = vpop.xlane.xlu0 %634
      %v636 = vsel %vm584, %v523, 0.0
      %637 = vadd.xlane.f32.xlu0 %v636
      %v638 = vpop.xlane.xlu0 %637
      %v639 = vsel %vm584, %v528, 0.0
      %640 = vadd.xlane.f32.xlu0 %v639
      %v641 = vpop.xlane.xlu0 %640
      %v642 = vsel %vm584, %v531, 0.0
      %643 = vadd.xlane.f32.xlu0 %v642
      %v644 = vpop.xlane.xlu0 %643
      %v645 = vsel %vm584, %v536, 0.0
      %646 = vadd.xlane.f32.xlu0 %v645
      %v647 = vpop.xlane.xlu0 %646
      %v648 = vsel %vm584, %v539, 0.0
      %649 = vadd.xlane.f32.xlu0 %v648
      %v650 = vpop.xlane.xlu0 %649
      %v651 = vsel %vm584, %v544, 0.0
      %652 = vadd.xlane.f32.xlu0 %v651
      %v653 = vpop.xlane.xlu0 %652
      %v654 = vsel %vm584, %v547, 0.0
      %655 = vadd.xlane.f32.xlu0 %v654
      %v656 = vpop.xlane.xlu0 %655
      %v657 = vsel %vm584, %v552, 0.0
      %658 = vadd.xlane.f32.xlu0 %v657
      %v659 = vpop.xlane.xlu0 %658
      %v660 = vsel %vm584, %v555, 0.0
      %661 = vadd.xlane.f32.xlu0 %v660
      %v662 = vpop.xlane.xlu0 %661
      %v663 = vsel %vm584, %v560, 0.0
      %664 = vadd.xlane.f32.xlu0 %v663
      %v665 = vpop.xlane.xlu0 %664
      %v666 = vsel %vm584, %v563, 0.0
      %667 = vadd.xlane.f32.xlu0 %v666
      %v668 = vpop.xlane.xlu0 %667
      %v669 = vsel %vm584, %v568, 0.0
      %670 = vadd.xlane.f32.xlu0 %v669
      %v671 = vpop.xlane.xlu0 %670
      %v672 = vsel %vm584, %v571, 0.0
      %673 = vadd.xlane.f32.xlu0 %v672
      %v674 = vpop.xlane.xlu0 %673
      %v675 = vsel %vm584, %v576, 0.0
      %676 = vadd.xlane.f32.xlu0 %v675
      %v677 = vpop.xlane.xlu0 %676
      %v678 = vsel %vm584, %v579, 0.0
      %679 = vadd.xlane.f32.xlu0 %v678
      %v680 = vpop.xlane.xlu0 %679
      %v681 = vrcp.pop 16.0
      %v682 = vmul.f32 %v587, %v681
      %v683 = vmul.f32 %v590, %v681
      %v684 = vmul.f32 %v593, %v681
      %v685 = vmul.f32 %v596, %v681
      %v686 = vmul.f32 %v599, %v681
      %v687 = vmul.f32 %v602, %v681
      %v688 = vmul.f32 %v605, %v681
      %v689 = vmul.f32 %v608, %v681
      %v690 = vmul.f32 %v611, %v681
      %v691 = vmul.f32 %v614, %v681
      %v692 = vmul.f32 %v617, %v681
      %v693 = vmul.f32 %v620, %v681
      %v694 = vmul.f32 %v623, %v681
      %v695 = vmul.f32 %v626, %v681
      %v696 = vmul.f32 %v629, %v681
      %v697 = vmul.f32 %v632, %v681
      %v698 = vmul.f32 %v635, %v681
      %v699 = vmul.f32 %v638, %v681
      %v700 = vmul.f32 %v641, %v681
      %v701 = vmul.f32 %v644, %v681
      %v702 = vmul.f32 %v647, %v681
      %v703 = vmul.f32 %v650, %v681
      %v704 = vmul.f32 %v653, %v681
      %v705 = vmul.f32 %v656, %v681
      %v706 = vmul.f32 %v659, %v681
      %v707 = vmul.f32 %v662, %v681
      %v708 = vmul.f32 %v665, %v681
      %v709 = vmul.f32 %v668, %v681
      %v710 = vmul.f32 %v671, %v681
      %v711 = vmul.f32 %v674, %v681
      %v712 = vmul.f32 %v677, %v681
      %v713 = vmul.f32 %v680, %v681
      %v714 = vsub.f32 %v456, %v682
      %v715 = vsub.f32 %v459, %v683
      %v716 = vsub.f32 %v464, %v684
      %v717 = vsub.f32 %v467, %v685
      %v718 = vsub.f32 %v472, %v686
      %v719 = vsub.f32 %v475, %v687
      %v720 = vsub.f32 %v480, %v688
      %v721 = vsub.f32 %v483, %v689
      %v722 = vsub.f32 %v488, %v690
      %v723 = vsub.f32 %v491, %v691
      %v724 = vsub.f32 %v496, %v692
      %v725 = vsub.f32 %v499, %v693
      %v726 = vsub.f32 %v504, %v694
      %v727 = vsub.f32 %v507, %v695
      %v728 = vsub.f32 %v512, %v696
      %v729 = vsub.f32 %v515, %v697
      %v730 = vsub.f32 %v520, %v698
      %v731 = vsub.f32 %v523, %v699
      %v732 = vsub.f32 %v528, %v700
      %v733 = vsub.f32 %v531, %v701
      %v734 = vsub.f32 %v536, %v702
      %v735 = vsub.f32 %v539, %v703
      %v736 = vsub.f32 %v544, %v704
      %v737 = vsub.f32 %v547, %v705
      %v738 = vsub.f32 %v552, %v706
      %v739 = vsub.f32 %v555, %v707
      %v740 = vsub.f32 %v560, %v708
      %v741 = vsub.f32 %v563, %v709
      %v742 = vsub.f32 %v568, %v710
      %v743 = vsub.f32 %v571, %v711
      %v744 = vsub.f32 %v576, %v712
      %v745 = vsub.f32 %v579, %v713
      %v746 = vmul.f32 %v714, %v714
      %v747 = vmul.f32 %v715, %v715
      %v748 = vmul.f32 %v716, %v716
      %v749 = vmul.f32 %v717, %v717
      %v750 = vmul.f32 %v718, %v718
      %v751 = vmul.f32 %v719, %v719
      %v752 = vmul.f32 %v720, %v720
      %v753 = vmul.f32 %v721, %v721
      %v754 = vmul.f32 %v722, %v722
      %v755 = vmul.f32 %v723, %v723
      %v756 = vmul.f32 %v724, %v724
      %v757 = vmul.f32 %v725, %v725
      %v758 = vmul.f32 %v726, %v726
      %v759 = vmul.f32 %v727, %v727
      %v760 = vmul.f32 %v728, %v728
      %v761 = vmul.f32 %v729, %v729
      %v762 = vmul.f32 %v730, %v730
      %v763 = vmul.f32 %v731, %v731
      %v764 = vmul.f32 %v732, %v732
      %v765 = vmul.f32 %v733, %v733
      %v766 = vmul.f32 %v734, %v734
      %v767 = vmul.f32 %v735, %v735
      %v768 = vmul.f32 %v736, %v736
      %v769 = vmul.f32 %v737, %v737
      %v770 = vmul.f32 %v738, %v738
      %v771 = vmul.f32 %v739, %v739
      %v772 = vmul.f32 %v740, %v740
      %v773 = vmul.f32 %v741, %v741
      %v774 = vmul.f32 %v742, %v742
      %v775 = vmul.f32 %v743, %v743
      %v776 = vmul.f32 %v744, %v744
      %v777 = vmul.f32 %v745, %v745
      %v778 = vsel %vm584, %v746, 0.0
      %779 = vadd.xlane.f32.xlu0 %v778
      %v780 = vpop.xlane.xlu0 %779
      %v781 = vsel %vm584, %v747, 0.0
      %782 = vadd.xlane.f32.xlu0 %v781
      %v783 = vpop.xlane.xlu0 %782
      %v784 = vsel %vm584, %v748, 0.0
      %785 = vadd.xlane.f32.xlu0 %v784
      %v786 = vpop.xlane.xlu0 %785
      %v787 = vsel %vm584, %v749, 0.0
      %788 = vadd.xlane.f32.xlu0 %v787
      %v789 = vpop.xlane.xlu0 %788
      %v790 = vsel %vm584, %v750, 0.0
      %791 = vadd.xlane.f32.xlu0 %v790
      %v792 = vpop.xlane.xlu0 %791
      %v793 = vsel %vm584, %v751, 0.0
      %794 = vadd.xlane.f32.xlu0 %v793
      %v795 = vpop.xlane.xlu0 %794
      %v796 = vsel %vm584, %v752, 0.0
      %797 = vadd.xlane.f32.xlu0 %v796
      %v798 = vpop.xlane.xlu0 %797
      %v799 = vsel %vm584, %v753, 0.0
      %800 = vadd.xlane.f32.xlu0 %v799
      %v801 = vpop.xlane.xlu0 %800
      %v802 = vsel %vm584, %v754, 0.0
      %803 = vadd.xlane.f32.xlu0 %v802
      %v804 = vpop.xlane.xlu0 %803
      %v805 = vsel %vm584, %v755, 0.0
      %806 = vadd.xlane.f32.xlu0 %v805
      %v807 = vpop.xlane.xlu0 %806
      %v808 = vsel %vm584, %v756, 0.0
      %809 = vadd.xlane.f32.xlu0 %v808
      %v810 = vpop.xlane.xlu0 %809
      %v811 = vsel %vm584, %v757, 0.0
      %812 = vadd.xlane.f32.xlu0 %v811
      %v813 = vpop.xlane.xlu0 %812
      %v814 = vsel %vm584, %v758, 0.0
      %815 = vadd.xlane.f32.xlu0 %v814
      %v816 = vpop.xlane.xlu0 %815
      %v817 = vsel %vm584, %v759, 0.0
      %818 = vadd.xlane.f32.xlu0 %v817
      %v819 = vpop.xlane.xlu0 %818
      %v820 = vsel %vm584, %v760, 0.0
      %821 = vadd.xlane.f32.xlu0 %v820
      %v822 = vpop.xlane.xlu0 %821
      %v823 = vsel %vm584, %v761, 0.0
      %824 = vadd.xlane.f32.xlu0 %v823
      %v825 = vpop.xlane.xlu0 %824
      %v826 = vsel %vm584, %v762, 0.0
      %827 = vadd.xlane.f32.xlu0 %v826
      %v828 = vpop.xlane.xlu0 %827
      %v829 = vsel %vm584, %v763, 0.0
      %830 = vadd.xlane.f32.xlu0 %v829
      %v831 = vpop.xlane.xlu0 %830
      %v832 = vsel %vm584, %v764, 0.0
      %833 = vadd.xlane.f32.xlu0 %v832
      %v834 = vpop.xlane.xlu0 %833
      %v835 = vsel %vm584, %v765, 0.0
      %836 = vadd.xlane.f32.xlu0 %v835
      %v837 = vpop.xlane.xlu0 %836
      %v838 = vsel %vm584, %v766, 0.0
      %839 = vadd.xlane.f32.xlu0 %v838
      %v840 = vpop.xlane.xlu0 %839
      %v841 = vsel %vm584, %v767, 0.0
      %842 = vadd.xlane.f32.xlu0 %v841
      %v843 = vpop.xlane.xlu0 %842
      %v844 = vsel %vm584, %v768, 0.0
      %845 = vadd.xlane.f32.xlu0 %v844
      %v846 = vpop.xlane.xlu0 %845
      %v847 = vsel %vm584, %v769, 0.0
      %848 = vadd.xlane.f32.xlu0 %v847
      %v849 = vpop.xlane.xlu0 %848
      %v850 = vsel %vm584, %v770, 0.0
      %851 = vadd.xlane.f32.xlu0 %v850
      %v852 = vpop.xlane.xlu0 %851
      %v853 = vsel %vm584, %v771, 0.0
      %854 = vadd.xlane.f32.xlu0 %v853
      %v855 = vpop.xlane.xlu0 %854
      %v856 = vsel %vm584, %v772, 0.0
      %857 = vadd.xlane.f32.xlu0 %v856
      %v858 = vpop.xlane.xlu0 %857
      %v859 = vsel %vm584, %v773, 0.0
      %860 = vadd.xlane.f32.xlu0 %v859
      %v861 = vpop.xlane.xlu0 %860
      %v862 = vsel %vm584, %v774, 0.0
      %863 = vadd.xlane.f32.xlu0 %v862
      %v864 = vpop.xlane.xlu0 %863
      %v865 = vsel %vm584, %v775, 0.0
      %866 = vadd.xlane.f32.xlu0 %v865
      %v867 = vpop.xlane.xlu0 %866
      %v868 = vsel %vm584, %v776, 0.0
      %869 = vadd.xlane.f32.xlu0 %v868
      %v870 = vpop.xlane.xlu0 %869
      %v871 = vsel %vm584, %v777, 0.0
      %872 = vadd.xlane.f32.xlu0 %v871
      %v873 = vpop.xlane.xlu0 %872
      %v874 = vmul.f32 %v780, %v681
      %v875 = vmul.f32 %v783, %v681
      %v876 = vmul.f32 %v786, %v681
      %v877 = vmul.f32 %v789, %v681
      %v878 = vmul.f32 %v792, %v681
      %v879 = vmul.f32 %v795, %v681
      %v880 = vmul.f32 %v798, %v681
      %v881 = vmul.f32 %v801, %v681
      %v882 = vmul.f32 %v804, %v681
      %v883 = vmul.f32 %v807, %v681
      %v884 = vmul.f32 %v810, %v681
      %v885 = vmul.f32 %v813, %v681
      %v886 = vmul.f32 %v816, %v681
      %v887 = vmul.f32 %v819, %v681
      %v888 = vmul.f32 %v822, %v681
      %v889 = vmul.f32 %v825, %v681
      %v890 = vmul.f32 %v828, %v681
      %v891 = vmul.f32 %v831, %v681
      %v892 = vmul.f32 %v834, %v681
      %v893 = vmul.f32 %v837, %v681
      %v894 = vmul.f32 %v840, %v681
      %v895 = vmul.f32 %v843, %v681
      %v896 = vmul.f32 %v846, %v681
      %v897 = vmul.f32 %v849, %v681
      %v898 = vmul.f32 %v852, %v681
      %v899 = vmul.f32 %v855, %v681
      %v900 = vmul.f32 %v858, %v681
      %v901 = vmul.f32 %v861, %v681
      %v902 = vmul.f32 %v864, %v681
      %v903 = vmul.f32 %v867, %v681
      %v904 = vmul.f32 %v870, %v681
      %v905 = vmul.f32 %v873, %v681
      %v906 = vadd.f32 %v874, 1e-05
      %v907 = vadd.f32 %v875, 1e-05
      %v908 = vadd.f32 %v876, 1e-05
      %v909 = vadd.f32 %v877, 1e-05
      %v910 = vadd.f32 %v878, 1e-05
      %v911 = vadd.f32 %v879, 1e-05
      %v912 = vadd.f32 %v880, 1e-05
      %v913 = vadd.f32 %v881, 1e-05
      %v914 = vadd.f32 %v882, 1e-05
      %v915 = vadd.f32 %v883, 1e-05
      %v916 = vadd.f32 %v884, 1e-05
      %v917 = vadd.f32 %v885, 1e-05
      %v918 = vadd.f32 %v886, 1e-05
      %v919 = vadd.f32 %v887, 1e-05
      %v920 = vadd.f32 %v888, 1e-05
      %v921 = vadd.f32 %v889, 1e-05
      %v922 = vadd.f32 %v890, 1e-05
      %v923 = vadd.f32 %v891, 1e-05
      %v924 = vadd.f32 %v892, 1e-05
      %v925 = vadd.f32 %v893, 1e-05
      %v926 = vadd.f32 %v894, 1e-05
      %v927 = vadd.f32 %v895, 1e-05
      %v928 = vadd.f32 %v896, 1e-05
      %v929 = vadd.f32 %v897, 1e-05
      %v930 = vadd.f32 %v898, 1e-05
      %v931 = vadd.f32 %v899, 1e-05
      %v932 = vadd.f32 %v900, 1e-05
      %v933 = vadd.f32 %v901, 1e-05
      %v934 = vadd.f32 %v902, 1e-05
      %v935 = vadd.f32 %v903, 1e-05
      %v936 = vadd.f32 %v904, 1e-05
      %v937 = vadd.f32 %v905, 1e-05
      %v938 = vrsqrt.pop %v906
      %v939 = vrsqrt.pop %v907
      %v940 = vrsqrt.pop %v908
      %v941 = vrsqrt.pop %v909
      %v942 = vrsqrt.pop %v910
      %v943 = vrsqrt.pop %v911
      %v944 = vrsqrt.pop %v912
      %v945 = vrsqrt.pop %v913
      %v946 = vrsqrt.pop %v914
      %v947 = vrsqrt.pop %v915
      %v948 = vrsqrt.pop %v916
      %v949 = vrsqrt.pop %v917
      %v950 = vrsqrt.pop %v918
      %v951 = vrsqrt.pop %v919
      %v952 = vrsqrt.pop %v920
      %v953 = vrsqrt.pop %v921
      %v954 = vrsqrt.pop %v922
      %v955 = vrsqrt.pop %v923
      %v956 = vrsqrt.pop %v924
      %v957 = vrsqrt.pop %v925
      %v958 = vrsqrt.pop %v926
      %v959 = vrsqrt.pop %v927
      %v960 = vrsqrt.pop %v928
      %v961 = vrsqrt.pop %v929
      %v962 = vrsqrt.pop %v930
      %v963 = vrsqrt.pop %v931
      %v964 = vrsqrt.pop %v932
      %v965 = vrsqrt.pop %v933
      %v966 = vrsqrt.pop %v934
      %v967 = vrsqrt.pop %v935
      %v968 = vrsqrt.pop %v936
      %v969 = vrsqrt.pop %v937
      %v970 = vmul.f32 %v714, %v938
      %v971 = vmul.f32 %v715, %v939
      %v972 = vmul.f32 %v716, %v940
      %v973 = vmul.f32 %v717, %v941
      %v974 = vmul.f32 %v718, %v942
      %v975 = vmul.f32 %v719, %v943
      %v976 = vmul.f32 %v720, %v944
      %v977 = vmul.f32 %v721, %v945
      %v978 = vmul.f32 %v722, %v946
      %v979 = vmul.f32 %v723, %v947
      %v980 = vmul.f32 %v724, %v948
      %v981 = vmul.f32 %v725, %v949
      %v982 = vmul.f32 %v726, %v950
      %v983 = vmul.f32 %v727, %v951
      %v984 = vmul.f32 %v728, %v952
      %v985 = vmul.f32 %v729, %v953
      %v986 = vmul.f32 %v730, %v954
      %v987 = vmul.f32 %v731, %v955
      %v988 = vmul.f32 %v732, %v956
      %v989 = vmul.f32 %v733, %v957
      %v990 = vmul.f32 %v734, %v958
      %v991 = vmul.f32 %v735, %v959
      %v992 = vmul.f32 %v736, %v960
      %v993 = vmul.f32 %v737, %v961
      %v994 = vmul.f32 %v738, %v962
      %v995 = vmul.f32 %v739, %v963
      %v996 = vmul.f32 %v740, %v964
      %v997 = vmul.f32 %v741, %v965
      %v998 = vmul.f32 %v742, %v966
      %v999 = vmul.f32 %v743, %v967
      %v1000 = vmul.f32 %v744, %v968
      %v1001 = vmul.f32 %v745, %v969
      %v1003 = vlaneseq
      %v1004 = vshrl.u32 %v1003, 7
      %v1005 = vsub.s32 0, %v1004
      %v1006 = vrot.slane %v582, %v1005
      %v1008 = vmul.f32 %v970, %v1006
      %v1009 = vmul.f32 %v971, %v1006
      %v1010 = vmul.f32 %v972, %v1006
      %v1011 = vmul.f32 %v973, %v1006
      %v1012 = vmul.f32 %v974, %v1006
      %v1013 = vmul.f32 %v975, %v1006
      %v1014 = vmul.f32 %v976, %v1006
      %v1015 = vmul.f32 %v977, %v1006
      %v1016 = vmul.f32 %v978, %v1006
      %v1017 = vmul.f32 %v979, %v1006
      %v1018 = vmul.f32 %v980, %v1006
      %v1019 = vmul.f32 %v981, %v1006
      %v1020 = vmul.f32 %v982, %v1006
      %v1021 = vmul.f32 %v983, %v1006
      %v1022 = vmul.f32 %v984, %v1006
      %v1023 = vmul.f32 %v985, %v1006
      %v1024 = vmul.f32 %v986, %v1006
      %v1025 = vmul.f32 %v987, %v1006
      %v1026 = vmul.f32 %v988, %v1006
      %v1027 = vmul.f32 %v989, %v1006
      %v1028 = vmul.f32 %v990, %v1006
      %v1029 = vmul.f32 %v991, %v1006
      %v1030 = vmul.f32 %v992, %v1006
      %v1031 = vmul.f32 %v993, %v1006
      %v1032 = vmul.f32 %v994, %v1006
      %v1033 = vmul.f32 %v995, %v1006
      %v1034 = vmul.f32 %v996, %v1006
      %v1035 = vmul.f32 %v997, %v1006
      %v1036 = vmul.f32 %v998, %v1006
      %v1037 = vmul.f32 %v999, %v1006
      %v1038 = vmul.f32 %v1000, %v1006
      %v1039 = vmul.f32 %v1001, %v1006
      %v1041 = vlaneseq
      %v1042 = vshrl.u32 %v1041, 7
      %v1043 = vsub.s32 0, %v1042
      %v1044 = vrot.slane %v583, %v1043
      %v1046 = vadd.f32 %v1008, %v1044
      %v1047 = vadd.f32 %v1009, %v1044
      %v1048 = vadd.f32 %v1010, %v1044
      %v1049 = vadd.f32 %v1011, %v1044
      %v1050 = vadd.f32 %v1012, %v1044
      %v1051 = vadd.f32 %v1013, %v1044
      %v1052 = vadd.f32 %v1014, %v1044
      %v1053 = vadd.f32 %v1015, %v1044
      %v1054 = vadd.f32 %v1016, %v1044
      %v1055 = vadd.f32 %v1017, %v1044
      %v1056 = vadd.f32 %v1018, %v1044
      %v1057 = vadd.f32 %v1019, %v1044
      %v1058 = vadd.f32 %v1020, %v1044
      %v1059 = vadd.f32 %v1021, %v1044
      %v1060 = vadd.f32 %v1022, %v1044
      %v1061 = vadd.f32 %v1023, %v1044
      %v1062 = vadd.f32 %v1024, %v1044
      %v1063 = vadd.f32 %v1025, %v1044
      %v1064 = vadd.f32 %v1026, %v1044
      %v1065 = vadd.f32 %v1027, %v1044
      %v1066 = vadd.f32 %v1028, %v1044
      %v1067 = vadd.f32 %v1029, %v1044
      %v1068 = vadd.f32 %v1030, %v1044
      %v1069 = vadd.f32 %v1031, %v1044
      %v1070 = vadd.f32 %v1032, %v1044
      %v1071 = vadd.f32 %v1033, %v1044
      %v1072 = vadd.f32 %v1034, %v1044
      %v1073 = vadd.f32 %v1035, %v1044
      %v1074 = vadd.f32 %v1036, %v1044
      %v1075 = vadd.f32 %v1037, %v1044
      %v1076 = vadd.f32 %v1038, %v1044
      %v1077 = vadd.f32 %v1039, %v1044
      %v1078 = vpack.c.bf16 %v1047, %v1046
      %v1079 = vpack.c.bf16 %v1049, %v1048
      %v1080 = vpack.c.bf16 %v1051, %v1050
      %v1081 = vpack.c.bf16 %v1053, %v1052
      %v1082 = vpack.c.bf16 %v1055, %v1054
      %v1083 = vpack.c.bf16 %v1057, %v1056
      %v1084 = vpack.c.bf16 %v1059, %v1058
      %v1085 = vpack.c.bf16 %v1061, %v1060
      %v1086 = vpack.c.bf16 %v1063, %v1062
      %v1087 = vpack.c.bf16 %v1065, %v1064
      %v1088 = vpack.c.bf16 %v1067, %v1066
      %v1089 = vpack.c.bf16 %v1069, %v1068
      %v1090 = vpack.c.bf16 %v1071, %v1070
      %v1091 = vpack.c.bf16 %v1073, %v1072
      %v1092 = vpack.c.bf16 %v1075, %v1074
      %v1093 = vpack.c.bf16 %v1077, %v1076
      %v1110 = vunpack.c.l.b16 %v1078
      %v1111 = vunpack.c.h.b16 %v1078
      %v1112 = vunpack.c.l.b16 %v1079
      %v1113 = vunpack.c.h.b16 %v1079
      %v1114 = vunpack.c.l.b16 %v1080
      %v1115 = vunpack.c.h.b16 %v1080
      %v1116 = vunpack.c.l.b16 %v1081
      %v1117 = vunpack.c.h.b16 %v1081
      %v1118 = vunpack.c.l.b16 %v1082
      %v1119 = vunpack.c.h.b16 %v1082
      %v1120 = vunpack.c.l.b16 %v1083
      %v1121 = vunpack.c.h.b16 %v1083
      %v1122 = vunpack.c.l.b16 %v1084
      %v1123 = vunpack.c.h.b16 %v1084
      %v1124 = vunpack.c.l.b16 %v1085
      %v1125 = vunpack.c.h.b16 %v1085
      %v1126 = vunpack.c.l.b16 %v1086
      %v1127 = vunpack.c.h.b16 %v1086
      %v1128 = vunpack.c.l.b16 %v1087
      %v1129 = vunpack.c.h.b16 %v1087
      %v1130 = vunpack.c.l.b16 %v1088
      %v1131 = vunpack.c.h.b16 %v1088
      %v1132 = vunpack.c.l.b16 %v1089
      %v1133 = vunpack.c.h.b16 %v1089
      %v1134 = vunpack.c.l.b16 %v1090
      %v1135 = vunpack.c.h.b16 %v1090
      %v1136 = vunpack.c.l.b16 %v1091
      %v1137 = vunpack.c.h.b16 %v1091
      %v1138 = vunpack.c.l.b16 %v1092
      %v1139 = vunpack.c.h.b16 %v1092
      %v1140 = vunpack.c.l.b16 %v1093
      %v1141 = vunpack.c.h.b16 %v1093
      %v1142 = vpack.c.b16 %v1110, %v1110
      %v1143 = vpack.c.b16 %v1111, %v1111
      %v1144 = vpack.c.b16 %v1112, %v1112
      %v1145 = vpack.c.b16 %v1113, %v1113
      %v1146 = vpack.c.b16 %v1114, %v1114
      %v1147 = vpack.c.b16 %v1115, %v1115
      %v1148 = vpack.c.b16 %v1116, %v1116
      %v1149 = vpack.c.b16 %v1117, %v1117
      %v1150 = vpack.c.b16 %v1118, %v1118
      %v1151 = vpack.c.b16 %v1119, %v1119
      %v1152 = vpack.c.b16 %v1120, %v1120
      %v1153 = vpack.c.b16 %v1121, %v1121
      %v1154 = vpack.c.b16 %v1122, %v1122
      %v1155 = vpack.c.b16 %v1123, %v1123
      %v1156 = vpack.c.b16 %v1124, %v1124
      %v1157 = vpack.c.b16 %v1125, %v1125
      %v1158 = vpack.c.b16 %v1126, %v1126
      %v1159 = vpack.c.b16 %v1127, %v1127
      %v1160 = vpack.c.b16 %v1128, %v1128
      %v1161 = vpack.c.b16 %v1129, %v1129
      %v1162 = vpack.c.b16 %v1130, %v1130
      %v1163 = vpack.c.b16 %v1131, %v1131
      %v1164 = vpack.c.b16 %v1132, %v1132
      %v1165 = vpack.c.b16 %v1133, %v1133
      %v1166 = vpack.c.b16 %v1134, %v1134
      %v1167 = vpack.c.b16 %v1135, %v1135
      %v1168 = vpack.c.b16 %v1136, %v1136
      %v1169 = vpack.c.b16 %v1137, %v1137
      %v1170 = vpack.c.b16 %v1138, %v1138
      %v1171 = vpack.c.b16 %v1139, %v1139
      %v1172 = vpack.c.b16 %v1140, %v1140
      %v1173 = vpack.c.b16 %v1141, %v1141
      %vm1206 = vcmask 125952
      %1207 = vst.msk [vmem:[%s226] sm:$0xf] %vm1206, %v1142
      %1208 = vst.msk [vmem:[%s226 + $0x4] sm:$0xf] %vm1206, %v1143
      %1209 = vst.msk [vmem:[%s226 + $0x8] sm:$0xf] %vm1206, %v1144
      %1210 = vst.msk [vmem:[%s226 + $0xc] sm:$0xf] %vm1206, %v1145
      %1211 = vst.msk [vmem:[%s226 + $0x10] sm:$0xf] %vm1206, %v1146
      %1212 = vst.msk [vmem:[%s226 + $0x14] sm:$0xf] %vm1206, %v1147
      %1213 = vst.msk [vmem:[%s226 + $0x18] sm:$0xf] %vm1206, %v1148
      %1214 = vst.msk [vmem:[%s226 + $0x1c] sm:$0xf] %vm1206, %v1149
      %1215 = vst.msk [vmem:[%s226 + $0x20] sm:$0xf] %vm1206, %v1150
      %1216 = vst.msk [vmem:[%s226 + $0x24] sm:$0xf] %vm1206, %v1151
      %1217 = vst.msk [vmem:[%s226 + $0x28] sm:$0xf] %vm1206, %v1152
      %1218 = vst.msk [vmem:[%s226 + $0x2c] sm:$0xf] %vm1206, %v1153
      %1219 = vst.msk [vmem:[%s226 + $0x30] sm:$0xf] %vm1206, %v1154
      %1220 = vst.msk [vmem:[%s226 + $0x34] sm:$0xf] %vm1206, %v1155
      %1221 = vst.msk [vmem:[%s226 + $0x38] sm:$0xf] %vm1206, %v1156
      %1222 = vst.msk [vmem:[%s226 + $0x3c] sm:$0xf] %vm1206, %v1157
      %1223 = vst.msk [vmem:[%s226 + $0x40] sm:$0xf] %vm1206, %v1158
      %1224 = vst.msk [vmem:[%s226 + $0x44] sm:$0xf] %vm1206, %v1159
      %1225 = vst.msk [vmem:[%s226 + $0x48] sm:$0xf] %vm1206, %v1160
      %1226 = vst.msk [vmem:[%s226 + $0x4c] sm:$0xf] %vm1206, %v1161
      %1227 = vst.msk [vmem:[%s226 + $0x50] sm:$0xf] %vm1206, %v1162
      %1228 = vst.msk [vmem:[%s226 + $0x54] sm:$0xf] %vm1206, %v1163
      %1229 = vst.msk [vmem:[%s226 + $0x58] sm:$0xf] %vm1206, %v1164
      %1230 = vst.msk [vmem:[%s226 + $0x5c] sm:$0xf] %vm1206, %v1165
      %1231 = vst.msk [vmem:[%s226 + $0x60] sm:$0xf] %vm1206, %v1166
      %1232 = vst.msk [vmem:[%s226 + $0x64] sm:$0xf] %vm1206, %v1167
      %1233 = vst.msk [vmem:[%s226 + $0x68] sm:$0xf] %vm1206, %v1168
      %1234 = vst.msk [vmem:[%s226 + $0x6c] sm:$0xf] %vm1206, %v1169
      %1235 = vst.msk [vmem:[%s226 + $0x70] sm:$0xf] %vm1206, %v1170
      %1236 = vst.msk [vmem:[%s226 + $0x74] sm:$0xf] %vm1206, %v1171
      %1237 = vst.msk [vmem:[%s226 + $0x78] sm:$0xf] %vm1206, %v1172
      %1238 = vst.msk [vmem:[%s226 + $0x7c] sm:$0xf] %vm1206, %v1173
      %s1239 = smul.u32 32, %s16
      %p1240 = scmp.lt.s32.totalorder %s1239, 63
      %s1241 = scalar_select %p1240, %s1239, 63
      %s1242 = smul.addr %s1241, 4
      %s1243 = scalar_lea.vmem %s5, %s1242
      // Predicated region
      $region41: #{tpu_custom_call.1} parent=39 // pred_check
        %p1244 = pneg %p144
      $region42: #{tpu_custom_call.1} parent=39 // pred_check_branch
        %1246 = sbr.rel (%p1244) target = $region44
      $region43: #{tpu_custom_call.1} parent=39 // pred_region
        %s1247 = smul.u32 32, %s16
      $region44: #{tpu_custom_call.1} parent=39 // pred_fallthru
        _
    $region40: #{tpu_custom_call.1} parent=5 // pred_fallthru
      _
    %p1248 = scmp.le.s32.totalorder 2, %s11
    // Predicated region
    $region45: #{tpu_custom_call.1} parent=5 // pred_check
      %p1249 = pneg %p1248
    $region46: #{tpu_custom_call.1} parent=5 // pred_check_branch
      %1251 = sbr.rel (%p1249) target = $region48
    $region47: #{tpu_custom_call.1} parent=5 // pred_region
      %s1252 = ssub.s32 %s11, 2
      // Predicated region
      $region49: #{tpu_custom_call.1} parent=47 // pred_check
        %p1253 = pneg %p150
      $region50: #{tpu_custom_call.1} parent=47 // pred_check_branch
        %1255 = sbr.rel (%p1253) target = $region52
      $region51: #{tpu_custom_call.1} parent=47 // pred_region
        %s1256 = smul.u32 32, %s17
        %p1257 = scmp.lt.s32.totalorder %s1256, 63
        %s1258 = scalar_select %p1257, %s1256, 63
        %s1259 = smul.addr %s1258, 4
        %s1260 = scalar_lea.vmem %s5, %s1259
      $region52: #{tpu_custom_call.1} parent=47 // pred_fallthru
        _
    $region48: #{tpu_custom_call.1} parent=5 // pred_fallthru
      _
  $region6: #{tpu_custom_call.1} parent=0 // loop_footer
    %s15 = sadd.s32 1, %s11
  $region7: #{tpu_custom_call.1} parent=0 // loop_footer_branch
    %10 = sbr.rel target = $region3
  $region8: #{tpu_custom_call.1} parent=0 // loop_exit
    _

</llo_original>
